<compile_context>
chip_gen: v5e
topology: v5e:2x2
jax: 0.10.0
libtpu: 0.0.40
codegen_flags: <defaults>
</compile_context>

<pallas_src>
import math

import jax
import jax.numpy as jnp
from jax.experimental import pallas as pl
from jax.experimental.pallas import tpu as pltpu

_LANES = 128
# Double-buffered pipeline footprint budget: 2 buffers * (x tile + out tile).
# 16 MiB fits comfortably inside the scoped VMEM limit on every generation
# (v5e 16 MiB default is raised to 32 MiB via vmem_limit_bytes below).
_PIPELINE_BUDGET_BYTES = 16 << 20
_MAX_TILE_ROWS = 1024  # diminishing returns past ~512-1024 rows


def _scaling_kernel(scale_ref, x_ref, o_ref):
    # scale_ref: (1, cols) parameter row, resident across the whole grid
    #            (constant block index -> DMA'd once).
    # x_ref/o_ref: (tile_b, cols) row tiles.
    # exp -> EUP (own VLIW slot), broadcast-multiply -> VPU; kernel is purely
    # HBM-bandwidth bound.
    scale = jnp.exp(scale_ref[...].astype(jnp.float32))
    o_ref[...] = (scale * x_ref[...].astype(jnp.float32)).astype(o_ref.dtype)


def _pick_tile_rows(rows: int, cols: int, itemsize: int) -> int:
    """Largest multiple-of-8 row tile that keeps the double-buffered pipeline
    (2 bufs * (in tile + out tile)) inside the VMEM budget."""
    max_rows = _PIPELINE_BUDGET_BYTES // (4 * cols * itemsize)
    tile = max(8, (max_rows // 8) * 8)
    tile = min(tile, _MAX_TILE_ROWS)
    if rows <= tile:
        return rows  # full extent is always a legal block shape
    return tile


def scaling_layer_forward(log_scale_vector: jax.Array, x: jax.Array) -> jax.Array:
    """Pallas implementation of ScalingLayer.forward.

    log_scale_vector: (1, input_dim)
    x:                (batch, input_dim)
    returns:          (batch, input_dim), same dtype as x
    """
    assert log_scale_vector.ndim == 2 and log_scale_vector.shape[0] == 1
    batch, input_dim = x.shape
    assert log_scale_vector.shape[1] == input_dim

    # --- present a lane-dense (multiple-of-128) last dim to the kernel -------
    # If input_dim is lane-sparse, fold R consecutive rows into the lane axis:
    #   x (batch, D) -> (batch // R, R * D), scale (1, D) -> (1, R * D).
    # Elementwise semantics are preserved exactly (row-major reshape matches a
    # tiled scale row), and stores become full-width vst instead of vst.msk.
    folded = False
    x2, scale2 = x, log_scale_vector
    if input_dim % _LANES != 0:
        r = _LANES // math.gcd(input_dim, _LANES)
        if r > 1 and batch % r == 0:
            x2 = x.reshape(batch // r, r * input_dim)
            scale2 = jnp.tile(log_scale_vector, (1, r))
            folded = True

    rows, cols = x2.shape
    tile_b = _pick_tile_rows(rows, cols, jnp.dtype(x.dtype).itemsize)
    grid = (pl.cdiv(rows, tile_b),)

    out = pl.pallas_call(
        _scaling_kernel,
        out_shape=jax.ShapeDtypeStruct((rows, cols), x.dtype),
        grid_spec=pltpu.PrefetchScalarGridSpec(
            num_scalar_prefetch=0,
            grid=grid,
            in_specs=[
                # Parameter row: constant block index -> stays resident in VMEM.
                pl.BlockSpec((1, cols), lambda i: (0, 0)),
                # x: one row tile per grid step (partial tail tile is padded by
                # Pallas; elementwise op makes the padded region harmless).
                pl.BlockSpec((tile_b, cols), lambda i: (i, 0)),
            ],
            out_specs=pl.BlockSpec((tile_b, cols), lambda i: (i, 0)),
        ),
        compiler_params=pltpu.CompilerParams(
            # Row tiles are fully independent -> shard across v7x's 2 TCs.
            dimension_semantics=("parallel",),
            # Raise v5e's 16 MiB scoped default; within defaults on v6e/v7x.
            vmem_limit_bytes=32 << 20,
        ),
    )(scale2, x2)

    if folded:
        out = out.reshape(batch, input_dim)
    return out


if __name__ == "__main__":
    key = jax.random.PRNGKey(0)
    k_param, k_x, k_x2 = jax.random.split(key, 3)

    # Small shape matching the module: nn.Parameter(torch.randn(1, input_dim)).
    batch, input_dim = 8, 32
    log_scale_vector = jax.random.normal(k_param, (1, input_dim), dtype=jnp.float32)
    x = jax.random.normal(k_x, (batch, input_dim), dtype=jnp.float32)

    out = scaling_layer_forward(log_scale_vector, x)
    out = jax.block_until_ready(out)

    ref = jnp.exp(log_scale_vector) * x
    assert out.shape == (batch, input_dim)
    assert jnp.allclose(out, ref, atol=1e-6, rtol=1e-6)

    # Secondary check: exercise the multi-step tiled / lane-dense path
    # (rows > TILE_B triggers the pipelined grid; still tiny data volume).
    b2, d2 = 2048, 256
    x_big = jax.random.normal(k_x2, (b2, d2), dtype=jnp.float32)
    scale_big = jax.random.normal(k_param, (1, d2), dtype=jnp.float32)
    out_big = jax.block_until_ready(scaling_layer_forward(scale_big, x_big))
    ref_big = jnp.exp(scale_big) * x_big
    assert jnp.allclose(out_big, ref_big, atol=1e-6, rtol=1e-6)

    # TODO(synk): ScalingLayer.inverse (exp(-log_scale) * z and log-det) is not
    # part of forward() and is not implemented here.
    print("KERNEL_OK")
</pallas_src>

<mosaic_0001>
module attributes {stable_mosaic.version = 11 : i64} {
  func.func @_scaling_kernel(%arg0: i32, %arg1: memref<1x128xf32, #tpu.memory_space<vmem>>, %arg2: memref<2x128xf32, #tpu.memory_space<vmem>>, %arg3: memref<2x128xf32, #tpu.memory_space<vmem>>) attributes {dimension_semantics = [#tpu.dimension_semantics<parallel>], iteration_bounds = array<i64: 1>, scalar_prefetch = 0 : i64, scratch_operands = 0 : i64, tpu.core_type = #tpu.core_type<tc>, window_params = [{pipeline_mode = #tpu.pipeline_mode<synchronous>, transform_indices = @transform_0, window_bounds = array<i64: 1, 128>}, {transform_indices = @transform_1, window_bounds = array<i64: 2, 128>}, {transform_indices = @transform_2, window_bounds = array<i64: 2, 128>}]} {
    %c0 = arith.constant 0 : index
    %c0_0 = arith.constant 0 : index
    %0 = vector.load %arg1[%c0, %c0_0] : memref<1x128xf32, #tpu.memory_space<vmem>>, vector<1x128xf32>
    %1 = math.exp %0 : vector<1x128xf32>
    %c0_1 = arith.constant 0 : index
    %c0_2 = arith.constant 0 : index
    %2 = vector.load %arg2[%c0_1, %c0_2] : memref<2x128xf32, #tpu.memory_space<vmem>>, vector<2x128xf32>
    %3 = vector.broadcast %1 : vector<1x128xf32> to vector<2x128xf32>
    %4 = arith.mulf %3, %2 : vector<2x128xf32>
    %c0_3 = arith.constant 0 : index
    %c0_4 = arith.constant 0 : index
    %5 = vector.load %arg3[%c0_3, %c0_4] : memref<2x128xf32, #tpu.memory_space<vmem>>, vector<2x128xf32>
    tpu.vector_store %arg3[%c0_3, %c0_4], %4 {strides = array<i32>} : memref<2x128xf32, #tpu.memory_space<vmem>>, vector<2x128xf32>,
    return
  }
  func.func @transform_0(%arg0: i32) -> (i32, i32) {
    %c0_i32 = arith.constant 0 : i32
    %c0_i32_0 = arith.constant 0 : i32
    %c0_i32_1 = arith.constant 0 : i32
    return %c0_i32, %c0_i32_0 : i32, i32
  }
  func.func @transform_1(%arg0: i32) -> (i32, i32) {
    %c0_i32 = arith.constant 0 : i32
    %c0_i32_0 = arith.constant 0 : i32
    return %arg0, %c0_i32 : i32, i32
  }
  func.func @transform_2(%arg0: i32) -> (i32, i32) {
    %c0_i32 = arith.constant 0 : i32
    %c0_i32_0 = arith.constant 0 : i32
    return %arg0, %c0_i32 : i32, i32
  }
}

</mosaic_0001>

<llo_original>
// kernel: tpu_custom_call.1
$region0: #{tpu_custom_call.1}
  #allocation0 [shape = 'u32[]', space=smem, size = 0x4, offset = 0x4, fixed_abs, tag = 'smem constant byte address 0x4 - core index']
  #allocation1 [shape = 'u32[72,128]{1,0:T(1,128)}', space=vmem, size = 0x9000, scoped, tag = 'internal scratch']
  %s0 = inlined_call_operand.hbm [shape: f32[1,128], index: 0, kind: input, shape index: {}]
  %s1 = inlined_call_operand.hbm [shape: f32[2,128], index: 1, kind: input, shape index: {}]
  %s2 = inlined_call_operand.hbm [shape: f32[2,128], index: 2, kind: output, shape index: {}]
  %s3 = sld [smem:[#allocation0]]
  $region26: #{tpu_custom_call.1} parent=0
    _
  %s5 = ssub.s32 1, %s3
  %s6 = scalar_select 0, %s5, %s3
  $region1: #{tpu_custom_call.1} parent=0
    #allocation2 [shape = 'u8[512]{0}', space=vmem, size = 0x400, scoped, tag = 'input window, operand 0, single buffered']
    #allocation3 [shape = 's32[1]{0}', space=sflag, size = 0x4, scoped, tag = 'scoped memory for tpu_custom_call.1']
    #allocation4 [shape = 's32[1]{0}', space=sflag, size = 0x4, scoped, tag = 'scoped memory for tpu_custom_call.1']
    #allocation5 [shape = 'u8[1024]{0}', space=vmem, size = 0x400, scoped, tag = 'input window, operand 1, single buffered']
    #allocation6 [shape = 's32[1]{0}', space=sflag, size = 0x4, scoped, tag = 'scoped memory for tpu_custom_call.1']
    #allocation7 [shape = 'u8[1024]{0}', space=vmem, size = 0x400, scoped, tag = 'output window, operand 0, single buffered']
    %7 = vsyncpa [#allocation3], 0
    %8 = vsyncpa [#allocation6], 0
    %9 = vsyncpa [#allocation4], 0
    // Predicated region
    $region2: #{tpu_custom_call.1} parent=1 // pred_check
      _
    $region3: #{tpu_custom_call.1} parent=1 // pred_check_branch
      %11 = sbr.rel (0) target = $region5
    $region4: #{tpu_custom_call.1} parent=1 // pred_region
      %13 = vsyncadd [#allocation3], 0
      %s15 = sshll.u32 %s0, 4
      %s16 = int_to_ptr.hbm [resolvable:$true] %s15
      %s17 = sshll.u32 [#allocation2], 4
      %s18 = int_to_ptr.vmem [resolvable:$true] %s17
      %20 = dma.hbm_to_vmem [thread:$0]  %s16, 16, %s18, [#allocation3]
    $region5: #{tpu_custom_call.1} parent=1 // pred_fallthru
      _
    // Predicated region
    $region6: #{tpu_custom_call.1} parent=1 // pred_check
      _
    $region7: #{tpu_custom_call.1} parent=1 // pred_check_branch
      %22 = sbr.rel (0) target = $region9
    $region8: #{tpu_custom_call.1} parent=1 // pred_region
      %24 = vsyncadd [#allocation6], 0
      %s26 = sshll.u32 %s1, 4
      %s27 = int_to_ptr.hbm [resolvable:$true] %s26
      %s28 = sshll.u32 [#allocation5], 4
      %s29 = int_to_ptr.vmem [resolvable:$true] %s28
      %31 = dma.hbm_to_vmem [thread:$0]  %s27, 32, %s29, [#allocation6]
    $region9: #{tpu_custom_call.1} parent=1 // pred_fallthru
      _
    // Predicated region
    $region10: #{tpu_custom_call.1} parent=1 // pred_check
      _
    $region11: #{tpu_custom_call.1} parent=1 // pred_check_branch
      %33 = sbr.rel (0) target = $region13
    $region12: #{tpu_custom_call.1} parent=1 // pred_region
      %35 = dma.done [#allocation3], 16
    $region13: #{tpu_custom_call.1} parent=1 // pred_fallthru
      _
    // Predicated region
    $region14: #{tpu_custom_call.1} parent=1 // pred_check
      _
    $region15: #{tpu_custom_call.1} parent=1 // pred_check_branch
      %37 = sbr.rel (0) target = $region17
    $region16: #{tpu_custom_call.1} parent=1 // pred_region
      %39 = dma.done [#allocation6], 32
    $region17: #{tpu_custom_call.1} parent=1 // pred_fallthru
      _
    %v40 = vld [vmem:[#allocation2] sm:$0x1]
    %v41 = vmul.f32 %v40, 1.442695
    %v42 = vpow.pop %v41
    %v43 = vld [vmem:[#allocation5] sm:$0x3]
    %v45 = vperm.slane %v42, 0
    %v47 = vmul.f32 %v45, %v43
    %48 = vst [vmem:[#allocation7] sm:$0x3] %v47
    // Predicated region
    $region18: #{tpu_custom_call.1} parent=1 // pred_check
      _
    $region19: #{tpu_custom_call.1} parent=1 // pred_check_branch
      %50 = sbr.rel (0) target = $region21
    $region20: #{tpu_custom_call.1} parent=1 // pred_region
      %52 = vsyncadd [#allocation4], 0
      %s54 = sshll.u32 [#allocation7], 4
      %s55 = int_to_ptr.vmem [resolvable:$true] %s54
      %s56 = sshll.u32 %s2, 4
      %s57 = int_to_ptr.hbm [resolvable:$true] %s56
      %59 = dma.vmem_to_hbm [thread:$0]  %s55, 32, %s57, [#allocation4]
    $region21: #{tpu_custom_call.1} parent=1 // pred_fallthru
      _
    // Predicated region
    $region22: #{tpu_custom_call.1} parent=1 // pred_check
      _
    $region23: #{tpu_custom_call.1} parent=1 // pred_check_branch
      %61 = sbr.rel (0) target = $region25
    $region24: #{tpu_custom_call.1} parent=1 // pred_region
      %63 = dma.done [#allocation4], 32
    $region25: #{tpu_custom_call.1} parent=1 // pred_fallthru
      _
    %64 = vsyncpa [#allocation3], 1
    %65 = vsyncpa [#allocation6], 1
    %66 = vsyncpa [#allocation4], 1

</llo_original>
